<compile_context>
chip_gen: v7x
topology: tpu7x:2x2x1
jax: 0.10.0
libtpu: 0.0.40
codegen_flags: <defaults>
</compile_context>

<pallas_src>
import jax
import jax.numpy as jnp
from jax import lax
from jax.experimental import pallas as pl
from jax.experimental.pallas import tpu as pltpu

EPS = 1e-5  # PyTorch InstanceNorm2d default eps


def _round_up(x, m):
    return (x + m - 1) // m * m


def _pick_block_n(n):
    """Samples per grid step: amortize per-step (~0.35us) + per-matmul fixed
    cost, but keep >= 2 grid steps when possible so both v7x TensorCores get
    'parallel' work.
    TODO(synk): chip-specific tuning - prefer >= 4 steps on v7x (2 per core so
    each core can double-buffer its block DMAs) and grow nb toward N on
    single-core v5e/v6e."""
    for nb in (8, 4, 2, 1):
        if n % nb == 0 and n // nb >= 2:
            return nb
    return n  # n == 1


def make_highres_block_kernel(H, W, Cin_pad, Cout_pad, nb, patch_dtype):
    # TODO(synk): only the module defaults are implemented (kernels=(3,3),
    # dilation=1, norm="instance", acti="relu", channel_matching="pad", 2D).
    HW = H * W
    MARGIN = W + 1            # zero lane-margin so every 3x3 tap is a static window
    HWP = HW + 2 * MARGIN     # padded lane width of the activation scratch
    K1 = 9 * Cin_pad          # conv1 contraction rows
    TAPS = tuple((dh, dw) for dh in (-1, 0, 1) for dw in (-1, 0, 1))

    def kernel(x_ref, w1_ref, b1_ref, w2_ref, b2_ref, o_ref, vpad_ref, patch_ref):
        # Hoisted, pre-broadcast column-edge masks (row edges are handled by the
        # zero lane-margins of vpad_ref).  Computed once per grid step.
        col = lax.broadcasted_iota(jnp.int32, (Cout_pad, HW), 1) % W
        not_left = col >= 1           # valid lanes for a dw = -1 tap
        not_right = col <= W - 2      # valid lanes for a dw = +1 tap

        # Re-zero only the two lane-margin strips of the activation scratch; the
        # centre is overwritten before every use (megacore-safe per-step init).
        zmargin = jnp.zeros((Cout_pad, MARGIN), jnp.float32)
        vpad_ref[:, pl.ds(0, MARGIN)] = zmargin
        vpad_ref[:, pl.ds(MARGIN + HW, MARGIN)] = zmargin

        w1r = w1_ref[...]             # (Cout_pad, 9*Cin_pad)
        w2r = w2_ref[...]             # (Cout,     9*Cout_pad + Cin_pad)
        b1 = b1_ref[...]              # (Cout_pad, 1) f32
        b2 = b2_ref[...]              # (Cout, 1) f32

        def inorm_relu(v):
            # Per-channel instance norm over the flattened spatial axis
            # (biased variance, no affine), then ReLU.  All-zero padding
            # channels stay exactly zero.
            mean = jnp.mean(v, axis=-1, keepdims=True)
            c = v - mean
            var = jnp.mean(c * c, axis=-1, keepdims=True)
            return jnp.maximum(c * lax.rsqrt(var + EPS), 0.0)

        def emit_taps(v, c_pad, n):
            # v: (c_pad, HW) activation of sample n (padding rows are zero).
            # Write the 9 im2col taps into patch_ref rows [t*c_pad, (t+1)*c_pad),
            # lanes [n*HW, (n+1)*HW): every store is a full sublane/lane-aligned
            # (c_pad, HW) tile (c_pad % 8 == 0, n*HW % 128 == 0).
            vpad_ref[pl.ds(0, c_pad), pl.ds(MARGIN, HW)] = v
            for t, (dh, dw) in enumerate(TAPS):
                tap = vpad_ref[pl.ds(0, c_pad), pl.ds(MARGIN + dh * W + dw, HW)]
                if dw == -1:
                    tap = jnp.where(not_left[:c_pad], tap, 0.0)
                elif dw == 1:
                    tap = jnp.where(not_right[:c_pad], tap, 0.0)
                patch_ref[pl.ds(t * c_pad, c_pad), pl.ds(n * HW, HW)] = (
                    tap.astype(patch_dtype))

        # ---- conv1: per-sample IN + ReLU -> im2col taps; ONE MXU matmul over
        #      all nb samples of the block (lane width nb*HW). ----
        for n in range(nb):           # small static unroll over samples
            emit_taps(inorm_relu(x_ref[n]), Cin_pad, n)
        h1 = jnp.dot(w1r, patch_ref[pl.ds(0, K1), :],
                     preferred_element_type=jnp.float32) + b1   # (Cout_pad, nb*HW) f32

        # ---- conv2: IN + ReLU -> taps, plus raw-x residual rows.  The residual
        #      is added by the identity columns appended to w2 host-side, so the
        #      output needs no read-modify-write. ----
        for n in range(nb):
            emit_taps(inorm_relu(h1[:, n * HW:(n + 1) * HW]), Cout_pad, n)
            patch_ref[pl.ds(9 * Cout_pad, Cin_pad), pl.ds(n * HW, HW)] = (
                x_ref[n].astype(patch_dtype))
        out = jnp.dot(w2r, patch_ref[...],
                      preferred_element_type=jnp.float32) + b2  # (Cout, nb*HW) f32

        for n in range(nb):
            o_ref[n] = out[:, n * HW:(n + 1) * HW].astype(o_ref.dtype)

    return kernel


def highres_block(x_nchw, w1, b1, w2, b2, *, use_bf16_matmul=False):
    """x_nchw: (N, Cin, H, W) f32. w1: (3,3,Cin,Cout) HWIO, w2: (3,3,Cout,Cout) HWIO.
    Returns (N, Cout, H, W).  (PyTorch OIHW weights map to HWIO via w.transpose(2,3,1,0).)
    With use_bf16_matmul=True, weights/patch are bf16 (f32 accumulation); expect a
    looser tolerance (~1e-2) vs the f32 reference."""
    N, Cin, H, W = x_nchw.shape
    assert w1.shape[:2] == (3, 3) and w2.shape[:2] == (3, 3)
    Cout = w1.shape[-1]
    assert Cin <= Cout, "channel_matching='pad' requires in_channels <= out_channels"
    pad1 = (Cout - Cin) // 2
    HW = H * W
    Cin_pad = _round_up(Cin, 8)
    Cout_pad = _round_up(Cout, 8)
    nb = _pick_block_n(N)
    L = nb * HW
    mm_dtype = jnp.bfloat16 if use_bf16_matmul else jnp.float32

    # channels -> sublanes (zero-padded to a multiple of 8 so all tap stores are
    # full aligned tiles), flattened spatial -> lanes; free reshape of NCHW.
    x = x_nchw.reshape(N, Cin, HW)
    if Cin_pad > Cin:
        x = jnp.pad(x, ((0, 0), (0, Cin_pad - Cin), (0, 0)))

    # conv1 weights: HWIO (3,3,Cin,Cout) -> (Cout_pad, 9*Cin_pad); taps row-major
    # over (kh, kw, cin) to match the in-kernel im2col tap order.  Zero columns
    # for the padded input channels, zero rows for the padded output channels
    # (so conv2's activation rows [Cout, Cout_pad) are exactly zero).
    w1t = jnp.transpose(w1, (3, 0, 1, 2))                                  # (Cout,3,3,Cin)
    w1t = jnp.pad(w1t, ((0, Cout_pad - Cout), (0, 0), (0, 0), (0, Cin_pad - Cin)))
    w1r = w1t.reshape(Cout_pad, 9 * Cin_pad).astype(mm_dtype)
    b1c = jnp.pad(b1, (0, Cout_pad - Cout)).reshape(Cout_pad, 1).astype(jnp.float32)

    # conv2 weights: (3,3,Cout,Cout) -> (Cout, 9*Cout_pad), plus Cin_pad identity
    # columns that add the channel-padded residual x inside the same MXU matmul.
    w2t = jnp.transpose(w2, (3, 0, 1, 2))                                  # (Cout,3,3,Cout)
    w2t = jnp.pad(w2t, ((0, 0), (0, 0), (0, 0), (0, Cout_pad - Cout)))
    w2c = w2t.reshape(Cout, 9 * Cout_pad)
    row_idx = jnp.arange(Cout)[:, None]
    col_idx = jnp.arange(Cin_pad)[None, :]
    res_eye = ((row_idx == col_idx + pad1) & (col_idx < Cin)).astype(w2c.dtype)
    w2r = jnp.concatenate([w2c, res_eye], axis=1).astype(mm_dtype)         # (Cout, 9*Cout_pad+Cin_pad)
    b2c = b2.reshape(Cout, 1).astype(jnp.float32)

    kernel = make_highres_block_kernel(H, W, Cin_pad, Cout_pad, nb, mm_dtype)
    K2 = 9 * Cout_pad + Cin_pad

    out = pl.pallas_call(
        kernel,
        out_shape=jax.ShapeDtypeStruct((N, Cout, HW), x_nchw.dtype),
        grid_spec=pltpu.PrefetchScalarGridSpec(
            num_scalar_prefetch=0,
            grid=(N // nb,),
            in_specs=[
                pl.BlockSpec((nb, Cin_pad, HW), lambda i: (i, 0, 0)),
                pl.BlockSpec((Cout_pad, 9 * Cin_pad), lambda i: (0, 0)),
                pl.BlockSpec((Cout_pad, 1), lambda i: (0, 0)),
                pl.BlockSpec((Cout, K2), lambda i: (0, 0)),
                pl.BlockSpec((Cout, 1), lambda i: (0, 0)),
            ],
            out_specs=pl.BlockSpec((nb, Cout, HW), lambda i: (i, 0, 0)),
            scratch_shapes=[
                pltpu.VMEM((Cout_pad, HW + 2 * (W + 1)), jnp.float32),  # zero-margined activation
                pltpu.VMEM((K2, L), mm_dtype),                          # batched im2col patch
            ],
        ),
        compiler_params=pltpu.CompilerParams(
            dimension_semantics=("parallel",)),
        # TODO(synk): at realistic highresnet sizes (large H*W, C>=64, 3D) the
        # patch scratch grows as ~36*C*nb*HW bytes; tile the H axis with a
        # 1-row halo, cap nb, and set vmem_limit_bytes against v7x's 64 MiB.
    )(x, w1r, b1c, w2r, b2c)

    return out.reshape(N, Cout, H, W)


def highres_block_ref(x_nchw, w1, b1, w2, b2):
    """Pure-JAX reference (XLA conv) for correctness check."""
    x = jnp.transpose(x_nchw, (0, 2, 3, 1))

    def inorm_relu(v):
        mean = jnp.mean(v, axis=(1, 2), keepdims=True)
        var = jnp.mean((v - mean) ** 2, axis=(1, 2), keepdims=True)
        return jnp.maximum((v - mean) * lax.rsqrt(var + EPS), 0.0)

    def conv(v, w, b):
        return lax.conv_general_dilated(
            v, w, window_strides=(1, 1), padding="SAME",
            dimension_numbers=("NHWC", "HWIO", "NHWC")) + b

    h = conv(inorm_relu(x), w1, b1)
    h = conv(inorm_relu(h), w2, b2)
    Cin, Cout = x.shape[-1], w1.shape[-1]
    p1 = (Cout - Cin) // 2
    p2 = Cout - Cin - p1
    res = jnp.pad(x, ((0, 0), (0, 0), (0, 0), (p1, p2)))
    return jnp.transpose(h + res, (0, 3, 1, 2))


if __name__ == "__main__":
    # HighResBlock(spatial_dims=2, in_channels=4, out_channels=8, kernels=(3,3),
    #              dilation=1, norm="instance", acti="relu", channel_matching="pad")
    N, Cin, Cout, H, W = 2, 4, 8, 16, 16
    key = jax.random.PRNGKey(0)
    kx, kw1, kb1, kw2, kb2 = jax.random.split(key, 5)

    x = jax.random.normal(kx, (N, Cin, H, W), jnp.float32)              # NCHW like PyTorch
    w1 = jax.random.normal(kw1, (3, 3, Cin, Cout), jnp.float32) * 0.1   # HWIO
    b1 = jax.random.normal(kb1, (Cout,), jnp.float32) * 0.1
    w2 = jax.random.normal(kw2, (3, 3, Cout, Cout), jnp.float32) * 0.1  # HWIO
    b2 = jax.random.normal(kb2, (Cout,), jnp.float32) * 0.1

    out = jax.block_until_ready(highres_block(x, w1, b1, w2, b2))
    ref = jax.block_until_ready(highres_block_ref(x, w1, b1, w2, b2))

    assert out.shape == (N, Cout, H, W)
    assert jnp.allclose(out, ref, atol=1e-4, rtol=1e-4), (
        f"max abs err {jnp.max(jnp.abs(out - ref))}")
    print("KERNEL_OK")
</pallas_src>

<mosaic_0001>
module attributes {stable_mosaic.version = 11 : i64} {
  func.func @kernel(%arg0: i32, %arg1: memref<1x8x256xf32, #tpu.memory_space<vmem>>, %arg2: memref<8x72xf32, #tpu.memory_space<vmem>>, %arg3: memref<8x1xf32, #tpu.memory_space<vmem>>, %arg4: memref<8x80xf32, #tpu.memory_space<vmem>>, %arg5: memref<8x1xf32, #tpu.memory_space<vmem>>, %arg6: memref<1x8x256xf32, #tpu.memory_space<vmem>>, %arg7: memref<8x290xf32, #tpu.memory_space<vmem>>, %arg8: memref<80x256xf32, #tpu.memory_space<vmem>>) attributes {dimension_semantics = [#tpu.dimension_semantics<parallel>], iteration_bounds = array<i64: 2>, scalar_prefetch = 0 : i64, scratch_operands = 2 : i64, tpu.core_type = #tpu.core_type<tc>, window_params = [{transform_indices = @transform_0, window_bounds = array<i64: 1, 8, 256>}, {pipeline_mode = #tpu.pipeline_mode<synchronous>, transform_indices = @transform_1, window_bounds = array<i64: 8, 72>}, {pipeline_mode = #tpu.pipeline_mode<synchronous>, transform_indices = @transform_2, window_bounds = array<i64: 8, 1>}, {pipeline_mode = #tpu.pipeline_mode<synchronous>, transform_indices = @transform_3, window_bounds = array<i64: 8, 80>}, {pipeline_mode = #tpu.pipeline_mode<synchronous>, transform_indices = @transform_4, window_bounds = array<i64: 8, 1>}, {transform_indices = @transform_5, window_bounds = array<i64: 1, 8, 256>}]} {
    %0 = tpu.iota {dimensions = array<i32: 1>} : vector<8x256xi32>
    %c16_i32 = arith.constant 16 : i32
    %c0_i32 = arith.constant 0 : i32
    %1 = arith.cmpi eq, %c16_i32, %c0_i32 : i32
    %c1_i32 = arith.constant 1 : i32
    %2 = arith.select %1, %c1_i32, %c16_i32 : i32
    %3 = vector.broadcast %2 : i32 to vector<8x256xi32>
    %4 = arith.remsi %0, %3 : vector<8x256xi32>
    %c0_i32_0 = arith.constant 0 : i32
    %5 = vector.broadcast %c0_i32_0 : i32 to vector<8x256xi32>
    %6 = arith.cmpi ne, %4, %5 : vector<8x256xi32>
    %c0_i32_1 = arith.constant 0 : i32
    %7 = vector.broadcast %c0_i32_1 : i32 to vector<8x256xi32>
    %8 = arith.cmpi slt, %4, %7 : vector<8x256xi32>
    %c0_i32_2 = arith.constant 0 : i32
    %9 = arith.cmpi slt, %2, %c0_i32_2 : i32
    %10 = vector.broadcast %9 : i1 to vector<8x256xi1>
    %11 = vector.broadcast %10 : vector<8x256xi1> to vector<8x256xi1>
    %12 = arith.xori %8, %11 : vector<8x256xi1>
    %13 = arith.andi %12, %6 : vector<8x256xi1>
    %14 = vector.broadcast %2 : i32 to vector<8x256xi32>
    %15 = arith.addi %4, %14 : vector<8x256xi32>
    %16 = arith.select %13, %15, %4 : vector<8x256xi1>, vector<8x256xi32>
    %c1_i32_3 = arith.constant 1 : i32
    %17 = vector.broadcast %c1_i32_3 : i32 to vector<8x256xi32>
    %18 = arith.cmpi sge, %16, %17 : vector<8x256xi32>
    %c14_i32 = arith.constant 14 : i32
    %19 = vector.broadcast %c14_i32 : i32 to vector<8x256xi32>
    %20 = arith.cmpi sle, %16, %19 : vector<8x256xi32>
    %cst = arith.constant 0.000000e+00 : f32
    %21 = vector.broadcast %cst : f32 to vector<8x17xf32>
    %c0 = arith.constant 0 : index
    %c0_4 = arith.constant 0 : index
    %22 = vector.load %arg7[%c0, %c0_4] : memref<8x290xf32, #tpu.memory_space<vmem>>, vector<8x17xf32>
    tpu.vector_store %arg7[%c0, %c0_4], %21 {strides = array<i32>} : memref<8x290xf32, #tpu.memory_space<vmem>>, vector<8x17xf32>,
    %c0_5 = arith.constant 0 : index
    %c273 = arith.constant 273 : index
    %23 = vector.load %arg7[%c0_5, %c273] : memref<8x290xf32, #tpu.memory_space<vmem>>, vector<8x17xf32>
    tpu.vector_store %arg7[%c0_5, %c273], %21 {strides = array<i32>} : memref<8x290xf32, #tpu.memory_space<vmem>>, vector<8x17xf32>,
    %c0_6 = arith.constant 0 : index
    %c0_7 = arith.constant 0 : index
    %24 = vector.load %arg2[%c0_6, %c0_7] : memref<8x72xf32, #tpu.memory_space<vmem>>, vector<8x72xf32>
    %c0_8 = arith.constant 0 : index
    %c0_9 = arith.constant 0 : index
    %25 = vector.load %arg4[%c0_8, %c0_9] : memref<8x80xf32, #tpu.memory_space<vmem>>, vector<8x80xf32>
    %c0_10 = arith.constant 0 : index
    %c0_11 = arith.constant 0 : index
    %26 = vector.load %arg3[%c0_10, %c0_11] : memref<8x1xf32, #tpu.memory_space<vmem>>, vector<8x1xf32>
    %c0_12 = arith.constant 0 : index
    %c0_13 = arith.constant 0 : index
    %27 = vector.load %arg5[%c0_12, %c0_13] : memref<8x1xf32, #tpu.memory_space<vmem>>, vector<8x1xf32>
    %c0_14 = arith.constant 0 : index
    %c0_15 = arith.constant 0 : index
    %c0_16 = arith.constant 0 : index
    %28 = vector.load %arg1[%c0_14, %c0_15, %c0_16] : memref<1x8x256xf32, #tpu.memory_space<vmem>>, vector<1x8x256xf32>
    %29 = vector.shape_cast %28 : vector<1x8x256xf32> to vector<8x256xf32>
    %cst_17 = arith.constant dense<0.000000e+00> : vector<8xf32>
    %30 = vector.multi_reduction <add>, %29, %cst_17 [1] : vector<8x256xf32> to vector<8xf32>
    %31 = vector.shape_cast %30 : vector<8xf32> to vector<8x1xf32>
    %cst_18 = arith.constant 2.560000e+02 : f32
    %32 = vector.broadcast %cst_18 : f32 to vector<8x1xf32>
    %33 = arith.divf %31, %32 : vector<8x1xf32>
    %34 = vector.broadcast %33 : vector<8x1xf32> to vector<8x256xf32>
    %35 = arith.subf %29, %34 : vector<8x256xf32>
    %36 = arith.mulf %35, %35 : vector<8x256xf32>
    %cst_19 = arith.constant dense<0.000000e+00> : vector<8xf32>
    %37 = vector.multi_reduction <add>, %36, %cst_19 [1] : vector<8x256xf32> to vector<8xf32>
    %38 = vector.shape_cast %37 : vector<8xf32> to vector<8x1xf32>
    %cst_20 = arith.constant 2.560000e+02 : f32
    %39 = vector.broadcast %cst_20 : f32 to vector<8x1xf32>
    %40 = arith.divf %38, %39 : vector<8x1xf32>
    %cst_21 = arith.constant 9.99999974E-6 : f32
    %41 = vector.broadcast %cst_21 : f32 to vector<8x1xf32>
    %42 = arith.addf %40, %41 : vector<8x1xf32>
    %43 = math.rsqrt %42 : vector<8x1xf32>
    %44 = vector.broadcast %43 : vector<8x1xf32> to vector<8x256xf32>
    %45 = arith.mulf %35, %44 : vector<8x256xf32>
    %cst_22 = arith.constant 0.000000e+00 : f32
    %46 = vector.broadcast %cst_22 : f32 to vector<8x256xf32>
    %47 = arith.maximumf %45, %46 : vector<8x256xf32>
    %c0_23 = arith.constant 0 : index
    %c17 = arith.constant 17 : index
    %48 = vector.load %arg7[%c0_23, %c17] : memref<8x290xf32, #tpu.memory_space<vmem>>, vector<8x256xf32>
    tpu.vector_store %arg7[%c0_23, %c17], %47 {strides = array<i32>} : memref<8x290xf32, #tpu.memory_space<vmem>>, vector<8x256xf32>,
    %c0_24 = arith.constant 0 : index
    %c0_25 = arith.constant 0 : index
    %49 = vector.load %arg7[%c0_24, %c0_25] : memref<8x290xf32, #tpu.memory_space<vmem>>, vector<8x256xf32>
    %cst_26 = arith.constant 0.000000e+00 : f32
    %50 = vector.broadcast %cst_26 : f32 to vector<8x256xf32>
    %51 = arith.select %18, %49, %50 : vector<8x256xi1>, vector<8x256xf32>
    %c0_27 = arith.constant 0 : index
    %c0_28 = arith.constant 0 : index
    %52 = vector.load %arg8[%c0_27, %c0_28] : memref<80x256xf32, #tpu.memory_space<vmem>>, vector<8x256xf32>
    tpu.vector_store %arg8[%c0_27, %c0_28], %51 {strides = array<i32>} : memref<80x256xf32, #tpu.memory_space<vmem>>, vector<8x256xf32>,
    %c0_29 = arith.constant 0 : index
    %c1 = arith.constant 1 : index
    %53 = vector.load %arg7[%c0_29, %c1] : memref<8x290xf32, #tpu.memory_space<vmem>>, vector<8x256xf32>
    %c8 = arith.constant 8 : index
    %c0_30 = arith.constant 0 : index
    %54 = vector.load %arg8[%c8, %c0_30] : memref<80x256xf32, #tpu.memory_space<vmem>>, vector<8x256xf32>
    tpu.vector_store %arg8[%c8, %c0_30], %53 {strides = array<i32>} : memref<80x256xf32, #tpu.memory_space<vmem>>, vector<8x256xf32>,
    %c0_31 = arith.constant 0 : index
    %c2 = arith.constant 2 : index
    %55 = vector.load %arg7[%c0_31, %c2] : memref<8x290xf32, #tpu.memory_space<vmem>>, vector<8x256xf32>
    %cst_32 = arith.constant 0.000000e+00 : f32
    %56 = vector.broadcast %cst_32 : f32 to vector<8x256xf32>
    %57 = arith.select %20, %55, %56 : vector<8x256xi1>, vector<8x256xf32>
    %c16 = arith.constant 16 : index
    %c0_33 = arith.constant 0 : index
    %58 = vector.load %arg8[%c16, %c0_33] : memref<80x256xf32, #tpu.memory_space<vmem>>, vector<8x256xf32>
    tpu.vector_store %arg8[%c16, %c0_33], %57 {strides = array<i32>} : memref<80x256xf32, #tpu.memory_space<vmem>>, vector<8x256xf32>,
    %c0_34 = arith.constant 0 : index
    %c16_35 = arith.constant 16 : index
    %59 = vector.load %arg7[%c0_34, %c16_35] : memref<8x290xf32, #tpu.memory_space<vmem>>, vector<8x256xf32>
    %cst_36 = arith.constant 0.000000e+00 : f32
    %60 = vector.broadcast %cst_36 : f32 to vector<8x256xf32>
    %61 = arith.select %18, %59, %60 : vector<8x256xi1>, vector<8x256xf32>
    %c24 = arith.constant 24 : index
    %c0_37 = arith.constant 0 : index
    %62 = vector.load %arg8[%c24, %c0_37] : memref<80x256xf32, #tpu.memory_space<vmem>>, vector<8x256xf32>
    tpu.vector_store %arg8[%c24, %c0_37], %61 {strides = array<i32>} : memref<80x256xf32, #tpu.memory_space<vmem>>, vector<8x256xf32>,
    %c0_38 = arith.constant 0 : index
    %c17_39 = arith.constant 17 : index
    %63 = vector.load %arg7[%c0_38, %c17_39] : memref<8x290xf32, #tpu.memory_space<vmem>>, vector<8x256xf32>
    %c32 = arith.constant 32 : index
    %c0_40 = arith.constant 0 : index
    %64 = vector.load %arg8[%c32, %c0_40] : memref<80x256xf32, #tpu.memory_space<vmem>>, vector<8x256xf32>
    tpu.vector_store %arg8[%c32, %c0_40], %63 {strides = array<i32>} : memref<80x256xf32, #tpu.memory_space<vmem>>, vector<8x256xf32>,
    %c0_41 = arith.constant 0 : index
    %c18 = arith.constant 18 : index
    %65 = vector.load %arg7[%c0_41, %c18] : memref<8x290xf32, #tpu.memory_space<vmem>>, vector<8x256xf32>
    %cst_42 = arith.constant 0.000000e+00 : f32
    %66 = vector.broadcast %cst_42 : f32 to vector<8x256xf32>
    %67 = arith.select %20, %65, %66 : vector<8x256xi1>, vector<8x256xf32>
    %c40 = arith.constant 40 : index
    %c0_43 = arith.constant 0 : index
    %68 = vector.load %arg8[%c40, %c0_43] : memref<80x256xf32, #tpu.memory_space<vmem>>, vector<8x256xf32>
    tpu.vector_store %arg8[%c40, %c0_43], %67 {strides = array<i32>} : memref<80x256xf32, #tpu.memory_space<vmem>>, vector<8x256xf32>,
    %c0_44 = arith.constant 0 : index
    %c32_45 = arith.constant 32 : index
    %69 = vector.load %arg7[%c0_44, %c32_45] : memref<8x290xf32, #tpu.memory_space<vmem>>, vector<8x256xf32>
    %cst_46 = arith.constant 0.000000e+00 : f32
    %70 = vector.broadcast %cst_46 : f32 to vector<8x256xf32>
    %71 = arith.select %18, %69, %70 : vector<8x256xi1>, vector<8x256xf32>
    %c48 = arith.constant 48 : index
    %c0_47 = arith.constant 0 : index
    %72 = vector.load %arg8[%c48, %c0_47] : memref<80x256xf32, #tpu.memory_space<vmem>>, vector<8x256xf32>
    tpu.vector_store %arg8[%c48, %c0_47], %71 {strides = array<i32>} : memref<80x256xf32, #tpu.memory_space<vmem>>, vector<8x256xf32>,
    %c0_48 = arith.constant 0 : index
    %c33 = arith.constant 33 : index
    %73 = vector.load %arg7[%c0_48, %c33] : memref<8x290xf32, #tpu.memory_space<vmem>>, vector<8x256xf32>
    %c56 = arith.constant 56 : index
    %c0_49 = arith.constant 0 : index
    %74 = vector.load %arg8[%c56, %c0_49] : memref<80x256xf32, #tpu.memory_space<vmem>>, vector<8x256xf32>
    tpu.vector_store %arg8[%c56, %c0_49], %73 {strides = array<i32>} : memref<80x256xf32, #tpu.memory_space<vmem>>, vector<8x256xf32>,
    %c0_50 = arith.constant 0 : index
    %c34 = arith.constant 34 : index
    %75 = vector.load %arg7[%c0_50, %c34] : memref<8x290xf32, #tpu.memory_space<vmem>>, vector<8x256xf32>
    %cst_51 = arith.constant 0.000000e+00 : f32
    %76 = vector.broadcast %cst_51 : f32 to vector<8x256xf32>
    %77 = arith.select %20, %75, %76 : vector<8x256xi1>, vector<8x256xf32>
    %c64 = arith.constant 64 : index
    %c0_52 = arith.constant 0 : index
    %78 = vector.load %arg8[%c64, %c0_52] : memref<80x256xf32, #tpu.memory_space<vmem>>, vector<8x256xf32>
    tpu.vector_store %arg8[%c64, %c0_52], %77 {strides = array<i32>} : memref<80x256xf32, #tpu.memory_space<vmem>>, vector<8x256xf32>,
    %c0_53 = arith.constant 0 : index
    %c0_54 = arith.constant 0 : index
    %79 = vector.load %arg8[%c0_53, %c0_54] : memref<80x256xf32, #tpu.memory_space<vmem>>, vector<72x256xf32>
    %cst_55 = arith.constant dense<0.000000e+00> : vector<8x256xf32>
    %80 = tpu.matmul %24, %79, %cst_55 {dimension_numbers = #tpu.dot_dimension_numbers<[1], [0], [0], [1], [0, 0, 1, 1], [], []>} : vector<8x72xf32>, vector<72x256xf32>, vector<8x256xf32> -> vector<8x256xf32>
    %81 = vector.broadcast %26 : vector<8x1xf32> to vector<8x256xf32>
    %82 = arith.addf %80, %81 : vector<8x256xf32>
    %cst_56 = arith.constant dense<0.000000e+00> : vector<8xf32>
    %83 = vector.multi_reduction <add>, %82, %cst_56 [1] : vector<8x256xf32> to vector<8xf32>
    %84 = vector.shape_cast %83 : vector<8xf32> to vector<8x1xf32>
    %cst_57 = arith.constant 2.560000e+02 : f32
    %85 = vector.broadcast %cst_57 : f32 to vector<8x1xf32>
    %86 = arith.divf %84, %85 : vector<8x1xf32>
    %87 = vector.broadcast %86 : vector<8x1xf32> to vector<8x256xf32>
    %88 = arith.subf %82, %87 : vector<8x256xf32>
    %89 = arith.mulf %88, %88 : vector<8x256xf32>
    %cst_58 = arith.constant dense<0.000000e+00> : vector<8xf32>
    %90 = vector.multi_reduction <add>, %89, %cst_58 [1] : vector<8x256xf32> to vector<8xf32>
    %91 = vector.shape_cast %90 : vector<8xf32> to vector<8x1xf32>
    %cst_59 = arith.constant 2.560000e+02 : f32
    %92 = vector.broadcast %cst_59 : f32 to vector<8x1xf32>
    %93 = arith.divf %91, %92 : vector<8x1xf32>
    %cst_60 = arith.constant 9.99999974E-6 : f32
    %94 = vector.broadcast %cst_60 : f32 to vector<8x1xf32>
    %95 = arith.addf %93, %94 : vector<8x1xf32>
    %96 = math.rsqrt %95 : vector<8x1xf32>
    %97 = vector.broadcast %96 : vector<8x1xf32> to vector<8x256xf32>
    %98 = arith.mulf %88, %97 : vector<8x256xf32>
    %cst_61 = arith.constant 0.000000e+00 : f32
    %99 = vector.broadcast %cst_61 : f32 to vector<8x256xf32>
    %100 = arith.maximumf %98, %99 : vector<8x256xf32>
    %c0_62 = arith.constant 0 : index
    %c17_63 = arith.constant 17 : index
    %101 = vector.load %arg7[%c0_62, %c17_63] : memref<8x290xf32, #tpu.memory_space<vmem>>, vector<8x256xf32>
    tpu.vector_store %arg7[%c0_62, %c17_63], %100 {strides = array<i32>} : memref<8x290xf32, #tpu.memory_space<vmem>>, vector<8x256xf32>,
    %c0_64 = arith.constant 0 : index
    %c0_65 = arith.constant 0 : index
    %102 = vector.load %arg7[%c0_64, %c0_65] : memref<8x290xf32, #tpu.memory_space<vmem>>, vector<8x256xf32>
    %cst_66 = arith.constant 0.000000e+00 : f32
    %103 = vector.broadcast %cst_66 : f32 to vector<8x256xf32>
    %104 = arith.select %18, %102, %103 : vector<8x256xi1>, vector<8x256xf32>
    %c0_67 = arith.constant 0 : index
    %c0_68 = arith.constant 0 : index
    %105 = vector.load %arg8[%c0_67, %c0_68] : memref<80x256xf32, #tpu.memory_space<vmem>>, vector<8x256xf32>
    tpu.vector_store %arg8[%c0_67, %c0_68], %104 {strides = array<i32>} : memref<80x256xf32, #tpu.memory_space<vmem>>, vector<8x256xf32>,
    %c0_69 = arith.constant 0 : index
    %c1_70 = arith.constant 1 : index
    %106 = vector.load %arg7[%c0_69, %c1_70] : memref<8x290xf32, #tpu.memory_space<vmem>>, vector<8x256xf32>
    %c8_71 = arith.constant 8 : index
    %c0_72 = arith.constant 0 : index
    %107 = vector.load %arg8[%c8_71, %c0_72] : memref<80x256xf32, #tpu.memory_space<vmem>>, vector<8x256xf32>
    tpu.vector_store %arg8[%c8_71, %c0_72], %106 {strides = array<i32>} : memref<80x256xf32, #tpu.memory_space<vmem>>, vector<8x256xf32>,
    %c0_73 = arith.constant 0 : index
    %c2_74 = arith.constant 2 : index
    %108 = vector.load %arg7[%c0_73, %c2_74] : memref<8x290xf32, #tpu.memory_space<vmem>>, vector<8x256xf32>
    %cst_75 = arith.constant 0.000000e+00 : f32
    %109 = vector.broadcast %cst_75 : f32 to vector<8x256xf32>
    %110 = arith.select %20, %108, %109 : vector<8x256xi1>, vector<8x256xf32>
    %c16_76 = arith.constant 16 : index
    %c0_77 = arith.constant 0 : index
    %111 = vector.load %arg8[%c16_76, %c0_77] : memref<80x256xf32, #tpu.memory_space<vmem>>, vector<8x256xf32>
    tpu.vector_store %arg8[%c16_76, %c0_77], %110 {strides = array<i32>} : memref<80x256xf32, #tpu.memory_space<vmem>>, vector<8x256xf32>,
    %c0_78 = arith.constant 0 : index
    %c16_79 = arith.constant 16 : index
    %112 = vector.load %arg7[%c0_78, %c16_79] : memref<8x290xf32, #tpu.memory_space<vmem>>, vector<8x256xf32>
    %cst_80 = arith.constant 0.000000e+00 : f32
    %113 = vector.broadcast %cst_80 : f32 to vector<8x256xf32>
    %114 = arith.select %18, %112, %113 : vector<8x256xi1>, vector<8x256xf32>
    %c24_81 = arith.constant 24 : index
    %c0_82 = arith.constant 0 : index
    %115 = vector.load %arg8[%c24_81, %c0_82] : memref<80x256xf32, #tpu.memory_space<vmem>>, vector<8x256xf32>
    tpu.vector_store %arg8[%c24_81, %c0_82], %114 {strides = array<i32>} : memref<80x256xf32, #tpu.memory_space<vmem>>, vector<8x256xf32>,
    %c0_83 = arith.constant 0 : index
    %c17_84 = arith.constant 17 : index
    %116 = vector.load %arg7[%c0_83, %c17_84] : memref<8x290xf32, #tpu.memory_space<vmem>>, vector<8x256xf32>
    %c32_85 = arith.constant 32 : index
    %c0_86 = arith.constant 0 : index
    %117 = vector.load %arg8[%c32_85, %c0_86] : memref<80x256xf32, #tpu.memory_space<vmem>>, vector<8x256xf32>
    tpu.vector_store %arg8[%c32_85, %c0_86], %116 {strides = array<i32>} : memref<80x256xf32, #tpu.memory_space<vmem>>, vector<8x256xf32>,
    %c0_87 = arith.constant 0 : index
    %c18_88 = arith.constant 18 : index
    %118 = vector.load %arg7[%c0_87, %c18_88] : memref<8x290xf32, #tpu.memory_space<vmem>>, vector<8x256xf32>
    %cst_89 = arith.constant 0.000000e+00 : f32
    %119 = vector.broadcast %cst_89 : f32 to vector<8x256xf32>
    %120 = arith.select %20, %118, %119 : vector<8x256xi1>, vector<8x256xf32>
    %c40_90 = arith.constant 40 : index
    %c0_91 = arith.constant 0 : index
    %121 = vector.load %arg8[%c40_90, %c0_91] : memref<80x256xf32, #tpu.memory_space<vmem>>, vector<8x256xf32>
    tpu.vector_store %arg8[%c40_90, %c0_91], %120 {strides = array<i32>} : memref<80x256xf32, #tpu.memory_space<vmem>>, vector<8x256xf32>,
    %c0_92 = arith.constant 0 : index
    %c32_93 = arith.constant 32 : index
    %122 = vector.load %arg7[%c0_92, %c32_93] : memref<8x290xf32, #tpu.memory_space<vmem>>, vector<8x256xf32>
    %cst_94 = arith.constant 0.000000e+00 : f32
    %123 = vector.broadcast %cst_94 : f32 to vector<8x256xf32>
    %124 = arith.select %18, %122, %123 : vector<8x256xi1>, vector<8x256xf32>
    %c48_95 = arith.constant 48 : index
    %c0_96 = arith.constant 0 : index
    %125 = vector.load %arg8[%c48_95, %c0_96] : memref<80x256xf32, #tpu.memory_space<vmem>>, vector<8x256xf32>
    tpu.vector_store %arg8[%c48_95, %c0_96], %124 {strides = array<i32>} : memref<80x256xf32, #tpu.memory_space<vmem>>, vector<8x256xf32>,
    %c0_97 = arith.constant 0 : index
    %c33_98 = arith.constant 33 : index
    %126 = vector.load %arg7[%c0_97, %c33_98] : memref<8x290xf32, #tpu.memory_space<vmem>>, vector<8x256xf32>
    %c56_99 = arith.constant 56 : index
    %c0_100 = arith.constant 0 : index
    %127 = vector.load %arg8[%c56_99, %c0_100] : memref<80x256xf32, #tpu.memory_space<vmem>>, vector<8x256xf32>
    tpu.vector_store %arg8[%c56_99, %c0_100], %126 {strides = array<i32>} : memref<80x256xf32, #tpu.memory_space<vmem>>, vector<8x256xf32>,
    %c0_101 = arith.constant 0 : index
    %c34_102 = arith.constant 34 : index
    %128 = vector.load %arg7[%c0_101, %c34_102] : memref<8x290xf32, #tpu.memory_space<vmem>>, vector<8x256xf32>
    %cst_103 = arith.constant 0.000000e+00 : f32
    %129 = vector.broadcast %cst_103 : f32 to vector<8x256xf32>
    %130 = arith.select %20, %128, %129 : vector<8x256xi1>, vector<8x256xf32>
    %c64_104 = arith.constant 64 : index
    %c0_105 = arith.constant 0 : index
    %131 = vector.load %arg8[%c64_104, %c0_105] : memref<80x256xf32, #tpu.memory_space<vmem>>, vector<8x256xf32>
    tpu.vector_store %arg8[%c64_104, %c0_105], %130 {strides = array<i32>} : memref<80x256xf32, #tpu.memory_space<vmem>>, vector<8x256xf32>,
    %c0_106 = arith.constant 0 : index
    %c0_107 = arith.constant 0 : index
    %c0_108 = arith.constant 0 : index
    %132 = vector.load %arg1[%c0_106, %c0_107, %c0_108] : memref<1x8x256xf32, #tpu.memory_space<vmem>>, vector<1x8x256xf32>
    %133 = vector.shape_cast %132 : vector<1x8x256xf32> to vector<8x256xf32>
    %c72 = arith.constant 72 : index
    %c0_109 = arith.constant 0 : index
    %134 = vector.load %arg8[%c72, %c0_109] : memref<80x256xf32, #tpu.memory_space<vmem>>, vector<8x256xf32>
    tpu.vector_store %arg8[%c72, %c0_109], %133 {strides = array<i32>} : memref<80x256xf32, #tpu.memory_space<vmem>>, vector<8x256xf32>,
    %c0_110 = arith.constant 0 : index
    %c0_111 = arith.constant 0 : index
    %135 = vector.load %arg8[%c0_110, %c0_111] : memref<80x256xf32, #tpu.memory_space<vmem>>, vector<80x256xf32>
    %cst_112 = arith.constant dense<0.000000e+00> : vector<8x256xf32>
    %136 = tpu.matmul %25, %135, %cst_112 {dimension_numbers = #tpu.dot_dimension_numbers<[1], [0], [0], [1], [0, 0, 1, 1], [], []>} : vector<8x80xf32>, vector<80x256xf32>, vector<8x256xf32> -> vector<8x256xf32>
    %137 = vector.broadcast %27 : vector<8x1xf32> to vector<8x256xf32>
    %138 = arith.addf %136, %137 : vector<8x256xf32>
    %c0_113 = arith.constant 0 : index
    %c0_114 = arith.constant 0 : index
    %c0_115 = arith.constant 0 : index
    %139 = vector.load %arg6[%c0_113, %c0_114, %c0_115] : memref<1x8x256xf32, #tpu.memory_space<vmem>>, vector<1x8x256xf32>
    %140 = vector.shape_cast %139 : vector<1x8x256xf32> to vector<8x256xf32>
    %141 = vector.shape_cast %138 : vector<8x256xf32> to vector<1x8x256xf32>
    tpu.vector_store %arg6[%c0_113, %c0_114, %c0_115], %141 {strides = array<i32>} : memref<1x8x256xf32, #tpu.memory_space<vmem>>, vector<1x8x256xf32>,
    return
  }
  func.func @transform_0(%arg0: i32) -> (i32, i32, i32) {
    %c0_i32 = arith.constant 0 : i32
    %c0_i32_0 = arith.constant 0 : i32
    %c0_i32_1 = arith.constant 0 : i32
    return %arg0, %c0_i32, %c0_i32_0 : i32, i32, i32
  }
  func.func @transform_1(%arg0: i32) -> (i32, i32) {
    %c0_i32 = arith.constant 0 : i32
    %c0_i32_0 = arith.constant 0 : i32
    %c0_i32_1 = arith.constant 0 : i32
    return %c0_i32, %c0_i32_0 : i32, i32
  }
  func.func @transform_2(%arg0: i32) -> (i32, i32) {
    %c0_i32 = arith.constant 0 : i32
    %c0_i32_0 = arith.constant 0 : i32
    %c0_i32_1 = arith.constant 0 : i32
    return %c0_i32, %c0_i32_0 : i32, i32
  }
  func.func @transform_3(%arg0: i32) -> (i32, i32) {
    %c0_i32 = arith.constant 0 : i32
    %c0_i32_0 = arith.constant 0 : i32
    %c0_i32_1 = arith.constant 0 : i32
    return %c0_i32, %c0_i32_0 : i32, i32
  }
  func.func @transform_4(%arg0: i32) -> (i32, i32) {
    %c0_i32 = arith.constant 0 : i32
    %c0_i32_0 = arith.constant 0 : i32
    %c0_i32_1 = arith.constant 0 : i32
    return %c0_i32, %c0_i32_0 : i32, i32
  }
  func.func @transform_5(%arg0: i32) -> (i32, i32, i32) {
    %c0_i32 = arith.constant 0 : i32
    %c0_i32_0 = arith.constant 0 : i32
    %c0_i32_1 = arith.constant 0 : i32
    return %arg0, %c0_i32, %c0_i32_0 : i32, i32, i32
  }
}

</mosaic_0001>

<llo_original>
// kernel: tpu_custom_call.1
$region0: #{tpu_custom_call.1}
  #allocation0 [shape = 'u32[]', space=smem, size = 0x4, offset = 0x4, fixed_abs, tag = 'smem constant byte address 0x4 - core index']
  #allocation1 [shape = 'u32[144,128]{1,0:T(1,128)}', space=vmem, size = 0x12000, scoped, tag = 'internal scratch']
  #allocation2 [shape = 'f32[8,290]{1,0:T(8,128)}', space=vmem, size = 0x3000, scoped, tag = 'scratch operand']
  #allocation3 [shape = 'f32[80,256]{1,0:T(8,128)}', space=vmem, size = 0x14000, scoped, tag = 'scratch operand']
  %s0 = inlined_call_operand.hbm [shape: f32[2,8,256], index: 0, kind: input, shape index: {}]
  %s1 = inlined_call_operand.vmem [shape: f32[8,72], index: 1, kind: input, shape index: {}]
  %s2 = inlined_call_operand.vmem [shape: f32[8,1], index: 2, kind: input, shape index: {}]
  %s3 = inlined_call_operand.vmem [shape: f32[8,80], index: 3, kind: input, shape index: {}]
  %s4 = inlined_call_operand.vmem [shape: f32[8,1], index: 4, kind: input, shape index: {}]
  %s5 = inlined_call_operand.hbm [shape: f32[2,8,256], index: 5, kind: output, shape index: {}]
  %s6 = sld [smem:[#allocation0]]
  $region57: #{tpu_custom_call.1} parent=0
    _
  %s8 = ssub.s32 1, %s6
  %s9 = scalar_select 0, %s8, %s6
  $region1: #{tpu_custom_call.1} parent=0
    #allocation4 [shape = 'u8[16384]{0}', space=vmem, size = 0x4000, scoped, tag = 'input window, operand 0']
    #allocation5 [shape = 's32[2]{0}', space=sflag, size = 0x8, scoped, tag = 'scoped memory for tpu_custom_call.1']
    #allocation6 [shape = 's32[2]{0}', space=sflag, size = 0x8, scoped, tag = 'scoped memory for tpu_custom_call.1']
    #allocation7 [shape = 'u8[16384]{0}', space=vmem, size = 0x4000, scoped, tag = 'output window, operand 0']
    %10 = vsyncpa [#allocation5], 0
    %s11 = scalar_lea.sflag [#allocation5], 1
    %12 = vsyncpa %s11, 0
    %13 = vsyncpa [#allocation6], 0
    %s14 = scalar_lea.sflag [#allocation6], 1
    %15 = vsyncpa %s14, 0
    loop: start=0, step=1, limit=4
    $region2: #{tpu_custom_call.1} parent=1 // loop_pre_header
      _
    $region3: #{tpu_custom_call.1} parent=1 // loop_header
      %s17 = sphi 0, %s21
      %p18 = scmp.ge.s32.totalorder %s17, 4
      %s27 = sphi 0, %s29
      %s30 = sphi 0, %s27
      %s31 = sphi 0, %s30
      %s47 = sphi 0, %s31
      %s51 = sphi 0, %s51
      %s53 = sphi 0, %s51
      %s54 = sphi 0, %s53
      %s68 = sphi 0, %s54
      %s72 = sphi 0, %s72
      %s74 = sphi 0, %s72
      %s75 = sphi 0, %s74
      %s89 = sphi 0, %s75
      %s93 = sphi 0, %s93
      %s95 = sphi 0, %s93
      %s96 = sphi 0, %s95
      %s110 = sphi 0, %s96
      %s114 = sphi 0, %s114
      %s116 = sphi 0, %s114
      %s117 = sphi 0, %s116
      %s131 = sphi 0, %s117
      %s137 = sphi 0, %s139
      %s140 = sphi 0, %s137
      %s141 = sphi 0, %s140
      %s157 = sphi 0, %s141
    $region4: #{tpu_custom_call.1} parent=1 // loop_header_branch
      %20 = sbr.rel (%p18) target = $region8
    $region5: #{tpu_custom_call.1} parent=1 // loop_body
      %s22 = ssub.s32 %s17, 1
      %s23 = ssub.s32 %s17, 2
      %s24 = sadd.s32 %s17, 1
      %s25 = ssub.s32 %s17, %s24
      %p26 = scmp.eq.s32.totalorder %s25, 0
      %s28 = sadd.s32 %s27, 1
      %s29 = scalar_select %p26, %s27, %s28
      %p32 = pneg %p26
      %p33 = scmp.eq.s32.totalorder %s17, 1
      %p34 = por %p32, %p33
      %p35 = scmp.ne.s32.totalorder %s27, %s30
      %p36 = scmp.eq.s32.totalorder %s17, 0
      %p37 = por %p35, %p36
      %p38 = scmp.ne.s32.totalorder %s27, %s30
      %p39 = scmp.eq.s32.totalorder %s22, 1
      %p40 = por %p38, %p39
      %p41 = scmp.ne.s32.totalorder %s30, %s31
      %p42 = scmp.eq.s32.totalorder %s22, 0
      %p43 = por %p41, %p42
      %p44 = scmp.ne.s32.totalorder %s30, %s31
      %p45 = scmp.eq.s32.totalorder %s23, 1
      %p46 = por %p44, %p45
      %p48 = scmp.ne.s32.totalorder %s31, %s47
      %p49 = scmp.eq.s32.totalorder %s23, 0
      %p50 = por %p48, %p49
      %s52 = sadd.s32 %s51, 1
      %p55 = scmp.eq.s32.totalorder %s17, 1
      %p56 = scmp.ne.s32.totalorder %s51, %s53
      %p57 = scmp.eq.s32.totalorder %s17, 0
      %p58 = por %p56, %p57
      %p59 = scmp.ne.s32.totalorder %s51, %s53
      %p60 = scmp.eq.s32.totalorder %s22, 1
      %p61 = por %p59, %p60
      %p62 = scmp.ne.s32.totalorder %s53, %s54
      %p63 = scmp.eq.s32.totalorder %s22, 0
      %p64 = por %p62, %p63
      %p65 = scmp.ne.s32.totalorder %s53, %s54
      %p66 = scmp.eq.s32.totalorder %s23, 1
      %p67 = por %p65, %p66
      %p69 = scmp.ne.s32.totalorder %s54, %s68
      %p70 = scmp.eq.s32.totalorder %s23, 0
      %p71 = por %p69, %p70
      %s73 = sadd.s32 %s72, 1
      %p76 = scmp.eq.s32.totalorder %s17, 1
      %p77 = scmp.ne.s32.totalorder %s72, %s74
      %p78 = scmp.eq.s32.totalorder %s17, 0
      %p79 = por %p77, %p78
      %p80 = scmp.ne.s32.totalorder %s72, %s74
      %p81 = scmp.eq.s32.totalorder %s22, 1
      %p82 = por %p80, %p81
      %p83 = scmp.ne.s32.totalorder %s74, %s75
      %p84 = scmp.eq.s32.totalorder %s22, 0
      %p85 = por %p83, %p84
      %p86 = scmp.ne.s32.totalorder %s74, %s75
      %p87 = scmp.eq.s32.totalorder %s23, 1
      %p88 = por %p86, %p87
      %p90 = scmp.ne.s32.totalorder %s75, %s89
      %p91 = scmp.eq.s32.totalorder %s23, 0
      %p92 = por %p90, %p91
      %s94 = sadd.s32 %s93, 1
      %p97 = scmp.eq.s32.totalorder %s17, 1
      %p98 = scmp.ne.s32.totalorder %s93, %s95
      %p99 = scmp.eq.s32.totalorder %s17, 0
      %p100 = por %p98, %p99
      %p101 = scmp.ne.s32.totalorder %s93, %s95
      %p102 = scmp.eq.s32.totalorder %s22, 1
      %p103 = por %p101, %p102
      %p104 = scmp.ne.s32.totalorder %s95, %s96
      %p105 = scmp.eq.s32.totalorder %s22, 0
      %p106 = por %p104, %p105
      %p107 = scmp.ne.s32.totalorder %s95, %s96
      %p108 = scmp.eq.s32.totalorder %s23, 1
      %p109 = por %p107, %p108
      %p111 = scmp.ne.s32.totalorder %s96, %s110
      %p112 = scmp.eq.s32.totalorder %s23, 0
      %p113 = por %p111, %p112
      %s115 = sadd.s32 %s114, 1
      %p118 = scmp.eq.s32.totalorder %s17, 1
      %p119 = scmp.ne.s32.totalorder %s114, %s116
      %p120 = scmp.eq.s32.totalorder %s17, 0
      %p121 = por %p119, %p120
      %p122 = scmp.ne.s32.totalorder %s114, %s116
      %p123 = scmp.eq.s32.totalorder %s22, 1
      %p124 = por %p122, %p123
      %p125 = scmp.ne.s32.totalorder %s116, %s117
      %p126 = scmp.eq.s32.totalorder %s22, 0
      %p127 = por %p125, %p126
      %p128 = scmp.ne.s32.totalorder %s116, %s117
      %p129 = scmp.eq.s32.totalorder %s23, 1
      %p130 = por %p128, %p129
      %p132 = scmp.ne.s32.totalorder %s117, %s131
      %p133 = scmp.eq.s32.totalorder %s23, 0
      %p134 = por %p132, %p133
      %s135 = ssub.s32 %s17, %s24
      %p136 = scmp.eq.s32.totalorder %s135, 0
      %s138 = sadd.s32 %s137, 1
      %s139 = scalar_select %p136, %s137, %s138
      %p142 = pneg %p136
      %p143 = scmp.eq.s32.totalorder %s17, 1
      %p144 = por %p142, %p143
      %p145 = scmp.ne.s32.totalorder %s137, %s140
      %p146 = scmp.eq.s32.totalorder %s17, 0
      %p147 = por %p145, %p146
      %p148 = scmp.ne.s32.totalorder %s137, %s140
      %p149 = scmp.eq.s32.totalorder %s22, 1
      %p150 = por %p148, %p149
      %p151 = scmp.ne.s32.totalorder %s140, %s141
      %p152 = scmp.eq.s32.totalorder %s22, 0
      %p153 = por %p151, %p152
      %p154 = scmp.ne.s32.totalorder %s140, %s141
      %p155 = scmp.eq.s32.totalorder %s23, 1
      %p156 = por %p154, %p155
      %p158 = scmp.ne.s32.totalorder %s141, %s157
      %p159 = scmp.eq.s32.totalorder %s23, 0
      %p160 = por %p158, %p159
      %p161 = scmp.le.s32.totalorder 1, %s17
      %p162 = scmp.lt.s32.totalorder %s17, 3
      %p163 = pnand %p161, %p162
      %p164 = pneg %p163
      // Predicated region
      $region9: #{tpu_custom_call.1} parent=5 // pred_check
        _
      $region10: #{tpu_custom_call.1} parent=5 // pred_check_branch
        %166 = sbr.rel (%p163) target = $region12
      $region11: #{tpu_custom_call.1} parent=5 // pred_region
        %s167 = ssub.s32 %s17, 1
        // Predicated region
        $region13: #{tpu_custom_call.1} parent=11 // pred_check
          %p168 = pneg %p64
        $region14: #{tpu_custom_call.1} parent=11 // pred_check_branch
          %170 = sbr.rel (%p168) target = $region16
        $region15: #{tpu_custom_call.1} parent=11 // pred_region
          _
        $region16: #{tpu_custom_call.1} parent=11 // pred_fallthru
          _
        // Predicated region
        $region17: #{tpu_custom_call.1} parent=11 // pred_check
          %p171 = pneg %p85
        $region18: #{tpu_custom_call.1} parent=11 // pred_check_branch
          %173 = sbr.rel (%p171) target = $region20
        $region19: #{tpu_custom_call.1} parent=11 // pred_region
          _
        $region20: #{tpu_custom_call.1} parent=11 // pred_fallthru
          _
        // Predicated region
        $region21: #{tpu_custom_call.1} parent=11 // pred_check
          %p174 = pneg %p106
        $region22: #{tpu_custom_call.1} parent=11 // pred_check_branch
          %176 = sbr.rel (%p174) target = $region24
        $region23: #{tpu_custom_call.1} parent=11 // pred_region
          _
        $region24: #{tpu_custom_call.1} parent=11 // pred_fallthru
          _
        // Predicated region
        $region25: #{tpu_custom_call.1} parent=11 // pred_check
          %p177 = pneg %p127
        $region26: #{tpu_custom_call.1} parent=11 // pred_check_branch
          %179 = sbr.rel (%p177) target = $region28
        $region27: #{tpu_custom_call.1} parent=11 // pred_region
          _
        $region28: #{tpu_custom_call.1} parent=11 // pred_fallthru
          _
      $region12: #{tpu_custom_call.1} parent=5 // pred_fallthru
        _
      %p180 = scmp.lt.s32.totalorder %s17, 2
      // Predicated region
      $region29: #{tpu_custom_call.1} parent=5 // pred_check
        %p181 = pneg %p180
      $region30: #{tpu_custom_call.1} parent=5 // pred_check_branch
        %183 = sbr.rel (%p181) target = $region32
      $region31: #{tpu_custom_call.1} parent=5 // pred_region
        // Predicated region
        $region33: #{tpu_custom_call.1} parent=31 // pred_check
          %p184 = pneg %p37
        $region34: #{tpu_custom_call.1} parent=31 // pred_check_branch
          %186 = sbr.rel (%p184) target = $region36
        $region35: #{tpu_custom_call.1} parent=31 // pred_region
          %s187 = sand.u32 %s27, 1
          %s188 = scalar_lea.sflag [#allocation5], %s187
          %s189 = sand.u32 %s27, 1
          %s190 = smul.addr %s189, 16
          %s191 = scalar_lea.vmem [#allocation4], %s190
          %s193 = ssub.s32 256, 256
          %194 = vsyncadd %s188, %s193
          %s195 = smul.addr %s17, 2
          %s196 = smul.addr %s195, 128
          %s197 = scalar_lea.hbm %s0, %s196
          %s199 = sshll.u32 %s191, 4
          %s200 = int_to_ptr.vmem [resolvable:$true] %s199
          %202 = dma.hbm_to_vmem [thread:$0]  %s197, 256, %s200, %s188
        $region36: #{tpu_custom_call.1} parent=31 // pred_fallthru
          _
      $region32: #{tpu_custom_call.1} parent=5 // pred_fallthru
        _
      %p203 = scmp.le.s32.totalorder 1, %s17
      %p204 = scmp.lt.s32.totalorder %s17, 3
      %p205 = pnand %p203, %p204
      %p206 = pneg %p205
      // Predicated region
      $region37: #{tpu_custom_call.1} parent=5 // pred_check
        _
      $region38: #{tpu_custom_call.1} parent=5 // pred_check_branch
        %208 = sbr.rel (%p205) target = $region40
      $region39: #{tpu_custom_call.1} parent=5 // pred_region
        %s209 = ssub.s32 %s17, 1
        %s210 = sand.u32 %s30, 1
        %s211 = scalar_lea.sflag [#allocation5], %s210
        %s212 = sand.u32 %s30, 1
        %s213 = smul.addr %s212, 16
        %s214 = scalar_lea.vmem [#allocation4], %s213
        // Predicated region
        $region41: #{tpu_custom_call.1} parent=39 // pred_check
          %p215 = pneg %p43
        $region42: #{tpu_custom_call.1} parent=39 // pred_check_branch
          %217 = sbr.rel (%p215) target = $region44
        $region43: #{tpu_custom_call.1} parent=39 // pred_region
          %218 = dma.done %s211, 256
        $region44: #{tpu_custom_call.1} parent=39 // pred_fallthru
          _
        %s219 = sand.u32 %s30, 1
        %s220 = scalar_lea.sflag [#allocation5], %s219
        %s221 = sand.u32 %s30, 1
        %s222 = smul.addr %s221, 16
        %s223 = scalar_lea.vmem [#allocation4], %s222
        %p224 = pneg %p43
        %p225 = pneg %p40
        %p226 = pneg %p64
        %p227 = pneg %p61
        %p228 = pneg %p85
        %p229 = pneg %p82
        %p230 = pneg %p106
        %p231 = pneg %p103
        %p232 = pneg %p127
        %p233 = pneg %p124
        %p234 = pneg %p153
        %p235 = pneg %p150
        %s236 = sand.u32 %s140, 1
        %s237 = scalar_lea.sflag [#allocation6], %s236
        %s238 = sand.u32 %s140, 1
        %s239 = smul.addr %s238, 16
        %s240 = scalar_lea.vmem [#allocation7], %s239
        %v241 = vlaneseq
        %v242 = vand.u32 %v241, 127
        %v243 = vadd.s32 %v242, 128
        %vm244 = vcmp.lt.s32.totalorder %v242, 0
        %v245 = vsub.s32 0, %v242
        %v246 = vsel %vm244, %v245, %v242
        %v247 = vshrl.u32 %v246, 4
        %v248 = vand.u32 %v246, 15
        %v249 = vsub.s32 0, %v248
        %v250 = vsel %vm244, %v249, %v248
        %vm251 = vcmp.lt.s32.totalorder %v243, 0
        %v252 = vsub.s32 0, %v243
        %v253 = vsel %vm251, %v252, %v243
        %v254 = vshrl.u32 %v253, 4
        %v255 = vand.u32 %v253, 15
        %v256 = vsub.s32 0, %v255
        %v257 = vsel %vm251, %v256, %v255
        %vm258 = vcmp.ne.s32.totalorder %v250, 0
        %vm259 = vcmp.ne.s32.totalorder %v257, 0
        %vm260 = vcmp.lt.s32.totalorder %v250, 0
        %vm261 = vcmp.lt.s32.totalorder %v257, 0
        %vm262 = vmand %vm260, %vm258
        %vm263 = vmand %vm261, %vm259
        %v264 = vadd.s32 %v250, 16
        %v265 = vadd.s32 %v257, 16
        %v266 = vsel %vm262, %v264, %v250
        %v267 = vsel %vm263, %v265, %v257
        %vm268 = vcmp.ge.s32.totalorder %v266, 1
        %vm269 = vcmp.ge.s32.totalorder %v267, 1
        %vm270 = vcmp.le.s32.totalorder %v266, 14
        %vm271 = vcmp.le.s32.totalorder %v267, 14
        %vm272 = vcmask 138240
        %273 = vst.msk [vmem:[#allocation2] sm:$0xff] %vm272, 0.0
        %vm274 = vcmask 277640
        %275 = vst.msk [vmem:[#allocation2 + $0x10] sm:$0xff] %vm274, 0.0
        %v276 = vld [vmem:[%s1] sm:$0xff]
        %v277 = vld [vmem:[%s3] sm:$0xff]
        %v278 = vld [vmem:[%s2] sm:$0xff]
        %v279 = vld [vmem:[%s4] sm:$0xff]
        %v280 = vld [vmem:[%s214] sm:$0xff]
        %v281 = vld [vmem:[%s214 + $0x8] sm:$0xff]
        %v282 = vadd.f32 %v280, %v281
        %283 = vadd.xlane.f32.xlu0 %v282
        %v284 = vpop.xlane.xlu0 %283
        %v285 = vrcp.pop 256.0
        %v286 = vmul.f32 %v284, %v285
        %v287 = vsub.f32 %v280, %v286
        %v288 = vsub.f32 %v281, %v286
        %v289 = vmul.f32 %v287, %v287
        %v290 = vmul.f32 %v288, %v288
        %v291 = vadd.f32 %v289, %v290
        %292 = vadd.xlane.f32.xlu0 %v291
        %v293 = vpop.xlane.xlu0 %292
        %v294 = vmul.f32 %v293, %v285
        %v295 = vadd.f32 %v294, 1e-05
        %v296 = vrsqrt.pop %v295
        %v297 = vmul.f32 %v287, %v296
        %v298 = vmul.f32 %v288, %v296
        %v299 = vmax.f32 %v297, 0.0
        %v300 = vmax.f32 %v298, 0.0
        %303 = vrot.lane.b32.xlu0 %v299, 17
        %v304 = vpop.permute.xlu0 %303
        %305 = vrot.lane.b32.xlu0 %v300, 17
        %v306 = vpop.permute.xlu0 %305
        %v307 = vsel %vm272, %v304, %v306
        %vm311 = vcmask 1047688
        %312 = vst.msk [vmem:[#allocation2] sm:$0xff] %vm311, %v304
        %313 = vst [vmem:[#allocation2 + $0x8] sm:$0xff] %v307
        %314 = vst.msk [vmem:[#allocation2 + $0x10] sm:$0xff] %vm272, %v306
        %v315 = vld [vmem:[#allocation2] sm:$0xff]
        %v316 = vld [vmem:[#allocation2 + $0x8] sm:$0xff]
        %v317 = vsel %vm268, %v315, 0.0
        %v318 = vsel %vm269, %v316, 0.0
        %319 = vst [vmem:[#allocation3] sm:$0xff] %v317
        %320 = vst [vmem:[#allocation3 + $0x8] sm:$0xff] %v318
        %v321 = vld [vmem:[#allocation2] sm:$0xff]
        %v322 = vld [vmem:[#allocation2 + $0x8] sm:$0xff]
        %v323 = vld [vmem:[#allocation2 + $0x10] sm:$0xff]
        %327 = vrot.lane.b32.xlu0 %v321, 127
        %v328 = vpop.permute.xlu0 %327
        %329 = vrot.lane.b32.xlu0 %v322, 127
        %v330 = vpop.permute.xlu0 %329
        %331 = vrot.lane.b32.xlu0 %v323, 127
        %v332 = vpop.permute.xlu0 %331
        %vm333 = vcmask 1039360
        %v334 = vsel %vm333, %v328, %v330
        %v335 = vsel %vm333, %v330, %v332
        %338 = vst [vmem:[#allocation3 + $0x10] sm:$0xff] %v334
        %339 = vst [vmem:[#allocation3 + $0x18] sm:$0xff] %v335
        %v340 = vld [vmem:[#allocation2] sm:$0xff]
        %v341 = vld [vmem:[#allocation2 + $0x8] sm:$0xff]
        %v342 = vld [vmem:[#allocation2 + $0x10] sm:$0xff]
        %346 = vrot.lane.b32.xlu0 %v340, 126
        %v347 = vpop.permute.xlu0 %346
        %348 = vrot.lane.b32.xlu0 %v341, 126
        %v349 = vpop.permute.xlu0 %348
        %350 = vrot.lane.b32.xlu0 %v342, 126
        %v351 = vpop.permute.xlu0 %350
        %vm352 = vcmask 1031168
        %v353 = vsel %vm352, %v347, %v349
        %v354 = vsel %vm352, %v349, %v351
        %v357 = vsel %vm270, %v353, 0.0
        %v358 = vsel %vm271, %v354, 0.0
        %359 = vst [vmem:[#allocation3 + $0x20] sm:$0xff] %v357
        %360 = vst [vmem:[#allocation3 + $0x28] sm:$0xff] %v358
        %v361 = vld [vmem:[#allocation2] sm:$0xff]
        %v362 = vld [vmem:[#allocation2 + $0x8] sm:$0xff]
        %v363 = vld [vmem:[#allocation2 + $0x10] sm:$0xff]
        %367 = vrot.lane.b32.xlu0 %v361, 112
        %v368 = vpop.permute.xlu0 %367
        %369 = vrot.lane.b32.xlu0 %v362, 112
        %v370 = vpop.permute.xlu0 %369
        %371 = vrot.lane.b32.xlu0 %v363, 112
        %v372 = vpop.permute.xlu0 %371
        %vm373 = vcmask 916480
        %v374 = vsel %vm373, %v368, %v370
        %v375 = vsel %vm373, %v370, %v372
        %v378 = vsel %vm268, %v374, 0.0
        %v379 = vsel %vm269, %v375, 0.0
        %380 = vst [vmem:[#allocation3 + $0x30] sm:$0xff] %v378
        %381 = vst [vmem:[#allocation3 + $0x38] sm:$0xff] %v379
        %v382 = vld [vmem:[#allocation2] sm:$0xff]
        %v383 = vld [vmem:[#allocation2 + $0x8] sm:$0xff]
        %v384 = vld [vmem:[#allocation2 + $0x10] sm:$0xff]
        %388 = vrot.lane.b32.xlu0 %v382, 111
        %v389 = vpop.permute.xlu0 %388
        %390 = vrot.lane.b32.xlu0 %v383, 111
        %v391 = vpop.permute.xlu0 %390
        %392 = vrot.lane.b32.xlu0 %v384, 111
        %v393 = vpop.permute.xlu0 %392
        %vm394 = vcmask 908288
        %v395 = vsel %vm394, %v389, %v391
        %v396 = vsel %vm394, %v391, %v393
        %399 = vst [vmem:[#allocation3 + $0x40] sm:$0xff] %v395
        %400 = vst [vmem:[#allocation3 + $0x48] sm:$0xff] %v396
        %v401 = vld [vmem:[#allocation2] sm:$0xff]
        %v402 = vld [vmem:[#allocation2 + $0x8] sm:$0xff]
        %v403 = vld [vmem:[#allocation2 + $0x10] sm:$0xff]
        %407 = vrot.lane.b32.xlu0 %v401, 110
        %v408 = vpop.permute.xlu0 %407
        %409 = vrot.lane.b32.xlu0 %v402, 110
        %v410 = vpop.permute.xlu0 %409
        %411 = vrot.lane.b32.xlu0 %v403, 110
        %v412 = vpop.permute.xlu0 %411
        %vm413 = vcmask 900096
        %v414 = vsel %vm413, %v408, %v410
        %v415 = vsel %vm413, %v410, %v412
        %v418 = vsel %vm270, %v414, 0.0
        %v419 = vsel %vm271, %v415, 0.0
        %420 = vst [vmem:[#allocation3 + $0x50] sm:$0xff] %v418
        %421 = vst [vmem:[#allocation3 + $0x58] sm:$0xff] %v419
        %v422 = vld [vmem:[#allocation2] sm:$0xff]
        %v423 = vld [vmem:[#allocation2 + $0x8] sm:$0xff]
        %v424 = vld [vmem:[#allocation2 + $0x10] sm:$0xff]
        %428 = vrot.lane.b32.xlu0 %v422, 96
        %v429 = vpop.permute.xlu0 %428
        %430 = vrot.lane.b32.xlu0 %v423, 96
        %v431 = vpop.permute.xlu0 %430
        %432 = vrot.lane.b32.xlu0 %v424, 96
        %v433 = vpop.permute.xlu0 %432
        %vm434 = vcmask 785408
        %v435 = vsel %vm434, %v429, %v431
        %v436 = vsel %vm434, %v431, %v433
        %v439 = vsel %vm268, %v435, 0.0
        %v440 = vsel %vm269, %v436, 0.0
        %441 = vst [vmem:[#allocation3 + $0x60] sm:$0xff] %v439
        %442 = vst [vmem:[#allocation3 + $0x68] sm:$0xff] %v440
        %v443 = vld [vmem:[#allocation2] sm:$0xff]
        %v444 = vld [vmem:[#allocation2 + $0x8] sm:$0xff]
        %v445 = vld [vmem:[#allocation2 + $0x10] sm:$0xff]
        %449 = vrot.lane.b32.xlu0 %v443, 95
        %v450 = vpop.permute.xlu0 %449
        %451 = vrot.lane.b32.xlu0 %v444, 95
        %v452 = vpop.permute.xlu0 %451
        %453 = vrot.lane.b32.xlu0 %v445, 95
        %v454 = vpop.permute.xlu0 %453
        %vm455 = vcmask 777216
        %v456 = vsel %vm455, %v450, %v452
        %v457 = vsel %vm455, %v452, %v454
        %460 = vst [vmem:[#allocation3 + $0x70] sm:$0xff] %v456
        %461 = vst [vmem:[#allocation3 + $0x78] sm:$0xff] %v457
        %v462 = vld [vmem:[#allocation2] sm:$0xff]
        %v463 = vld [vmem:[#allocation2 + $0x8] sm:$0xff]
        %v464 = vld [vmem:[#allocation2 + $0x10] sm:$0xff]
        %468 = vrot.lane.b32.xlu0 %v462, 94
        %v469 = vpop.permute.xlu0 %468
        %470 = vrot.lane.b32.xlu0 %v463, 94
        %v471 = vpop.permute.xlu0 %470
        %472 = vrot.lane.b32.xlu0 %v464, 94
        %v473 = vpop.permute.xlu0 %472
        %vm474 = vcmask 769024
        %v475 = vsel %vm474, %v469, %v471
        %v476 = vsel %vm474, %v471, %v473
        %v479 = vsel %vm270, %v475, 0.0
        %v480 = vsel %vm271, %v476, 0.0
        %481 = vst [vmem:[#allocation3 + $0x80] sm:$0xff] %v479
        %482 = vst [vmem:[#allocation3 + $0x88] sm:$0xff] %v480
        %v483 = vld [vmem:[#allocation3] sm:$0xff]
        %v484 = vld [vmem:[#allocation3 + $0x8] sm:$0xff]
        %v485 = vld [vmem:[#allocation3 + $0x10] sm:$0xff]
        %v486 = vld [vmem:[#allocation3 + $0x18] sm:$0xff]
        %v487 = vld [vmem:[#allocation3 + $0x20] sm:$0xff]
        %v488 = vld [vmem:[#allocation3 + $0x28] sm:$0xff]
        %v489 = vld [vmem:[#allocation3 + $0x30] sm:$0xff]
        %v490 = vld [vmem:[#allocation3 + $0x38] sm:$0xff]
        %v491 = vld [vmem:[#allocation3 + $0x40] sm:$0xff]
        %v492 = vld [vmem:[#allocation3 + $0x48] sm:$0xff]
        %v493 = vld [vmem:[#allocation3 + $0x50] sm:$0xff]
        %v494 = vld [vmem:[#allocation3 + $0x58] sm:$0xff]
        %v495 = vld [vmem:[#allocation3 + $0x60] sm:$0xff]
        %v496 = vld [vmem:[#allocation3 + $0x68] sm:$0xff]
        %v497 = vld [vmem:[#allocation3 + $0x70] sm:$0xff]
        %v498 = vld [vmem:[#allocation3 + $0x78] sm:$0xff]
        %v499 = vld [vmem:[#allocation3 + $0x80] sm:$0xff]
        %v500 = vld [vmem:[#allocation3 + $0x88] sm:$0xff]
        %502 = vset.pattern.permute.xlu0 0
        %503 = vperm.xlu0 %502, %v278
        %v504 = vpop.permute.xlu0 %503
        %vm506 = vcmask 588800
        %v508 = vsel %vm506, %v276, 0
        %510 = vmatprep.subr.mxu0 %v484
        %511 = vmatpush1.msra.mxu0 %v483
        %512 = vmatprep.subr.mxu0 %v486
        %513 = vmatpush1.msra.mxu0 %v485
        %514 = vmatprep.subr.mxu0 %v488
        %515 = vmatpush1.msra.mxu0 %v487
        %516 = vmatprep.subr.mxu0 %v490
        %517 = vmatpush1.msra.mxu0 %v489
        %518 = vmatprep.subr.mxu0 %v492
        %519 = vmatpush1.msra.mxu0 %v491
        %520 = vmatprep.subr.mxu0 %v494
        %521 = vmatpush1.msra.mxu0 %v493
        %522 = vmatprep.subr.mxu0 %v496
        %523 = vmatpush1.msra.mxu0 %v495
        %524 = vmatprep.subr.mxu0 %v498
        %525 = vmatpush1.msra.mxu0 %v497
        %526 = vmatprep.subr.mxu0 %v500
        %527 = vmatpush1.msra.mxu0 %v499
        %528 = vmatprep.subr.mxu0 0.0
        %529 = vmatpush1.msra.mxu0 0.0
        %530 = vmatprep.subr.mxu0 0.0
        %531 = vmatpush1.msra.mxu0 0.0
        %532 = vmatprep.subr.mxu0 0.0
        %533 = vmatpush1.msra.mxu0 0.0
        %534 = vmatprep.subr.mxu0 0.0
        %535 = vmatpush1.msra.mxu0 0.0
        %536 = vmatprep.subr.mxu0 0.0
        %537 = vmatpush1.msra.mxu0 0.0
        %538 = vmatprep.subr.mxu0 0.0
        %539 = vmatpush1.msra.mxu0 0.0
        %540 = vmatprep.subr.mxu0 0.0
        %541 = vmatpush1.msra.mxu0 0.0
        %542 = vmatprep.subr.mxu0 0.0
        %543 = vmatpush1.msra.mxu0 0.0
        %544 = vmatprep.subr.mxu0 0.0
        %545 = vmatpush1.msra.mxu0 0.0
        %546 = vmatprep.subr.mxu0 0.0
        %547 = vmatpush1.msra.mxu0 0.0
        %548 = vmatprep.subr.mxu0 0.0
        %549 = vmatpush1.msra.mxu0 0.0
        %550 = vmatprep.subr.mxu0 0.0
        %551 = vmatpush1.msra.mxu0 0.0
        %552 = vmatprep.subr.mxu0 0.0
        %553 = vmatpush1.msra.mxu0 0.0
        %554 = vmatprep.subr.mxu0 0.0
        %555 = vmatpush1.msra.mxu0 0.0
        %556 = vmatprep.subr.mxu0 0.0
        %557 = vmatpush1.msra.mxu0 0.0
        %558 = vmatprep.subr.mxu0 0.0
        %559 = vmatpush1.msra.mxu0 0.0
        %560 = vmatprep.subr.mxu0 0.0
        %561 = vmatpush1.msra.mxu0 0.0
        %562 = vmatprep.subr.mxu0 0.0
        %563 = vmatpush1.msra.mxu0 0.0
        %564 = vmatprep.subr.mxu0 0.0
        %565 = vmatpush1.msra.mxu0 0.0
        %566 = vmatprep.subr.mxu0 0.0
        %567 = vmatpush1.msra.mxu0 0.0
        %568 = vmatprep.subr.mxu0 0.0
        %569 = vmatpush1.msra.mxu0 0.0
        %570 = vmatprep.subr.mxu0 0.0
        %571 = vmatpush1.msra.mxu0 0.0
        %572 = vmatprep.subr.mxu0 0.0
        %573 = vmatpush1.msra.mxu0 0.0
        %574 = vmatprep.mubr.f32.mxu0 0.0
        %575 = vmatmul.mubr.f32.gmra.mrb[0].mxu0 %v508
        %v576 = vpop.f32.mrb[0].mxu0
        %v577 = vadd.f32 %v504, %v576
        %v578 = vpop.f32.mrb[0].mxu0
        %v579 = vadd.f32 %v504, %v578
        %580 = vdwg.mxu0
        %v581 = vadd.f32 %v577, %v579
        %582 = vadd.xlane.f32.xlu0 %v581
        %v583 = vpop.xlane.xlu0 %582
        %v584 = vmul.f32 %v583, %v285
        %v585 = vsub.f32 %v577, %v584
        %v586 = vsub.f32 %v579, %v584
        %v587 = vmul.f32 %v585, %v585
        %v588 = vmul.f32 %v586, %v586
        %v589 = vadd.f32 %v587, %v588
        %590 = vadd.xlane.f32.xlu0 %v589
        %v591 = vpop.xlane.xlu0 %590
        %v592 = vmul.f32 %v591, %v285
        %v593 = vadd.f32 %v592, 1e-05
        %v594 = vrsqrt.pop %v593
        %v595 = vmul.f32 %v585, %v594
        %v596 = vmul.f32 %v586, %v594
        %v597 = vmax.f32 %v595, 0.0
        %v598 = vmax.f32 %v596, 0.0
        %601 = vrot.lane.b32.xlu0 %v597, 17
        %v602 = vpop.permute.xlu0 %601
        %603 = vrot.lane.b32.xlu0 %v598, 17
        %v604 = vpop.permute.xlu0 %603
        %v605 = vsel %vm272, %v602, %v604
        %609 = vst.msk [vmem:[#allocation2] sm:$0xff] %vm311, %v602
        %610 = vst [vmem:[#allocation2 + $0x8] sm:$0xff] %v605
        %611 = vst.msk [vmem:[#allocation2 + $0x10] sm:$0xff] %vm272, %v604
        %v612 = vld [vmem:[#allocation2] sm:$0xff]
        %v613 = vld [vmem:[#allocation2 + $0x8] sm:$0xff]
        %v614 = vsel %vm268, %v612, 0.0
        %v615 = vsel %vm269, %v613, 0.0
        %616 = vst [vmem:[#allocation3] sm:$0xff] %v614
        %617 = vst [vmem:[#allocation3 + $0x8] sm:$0xff] %v615
        %v618 = vld [vmem:[#allocation2] sm:$0xff]
        %v619 = vld [vmem:[#allocation2 + $0x8] sm:$0xff]
        %v620 = vld [vmem:[#allocation2 + $0x10] sm:$0xff]
        %624 = vrot.lane.b32.xlu0 %v618, 127
        %v625 = vpop.permute.xlu0 %624
        %626 = vrot.lane.b32.xlu0 %v619, 127
        %v627 = vpop.permute.xlu0 %626
        %628 = vrot.lane.b32.xlu0 %v620, 127
        %v629 = vpop.permute.xlu0 %628
        %v630 = vsel %vm333, %v625, %v627
        %v631 = vsel %vm333, %v627, %v629
        %634 = vst [vmem:[#allocation3 + $0x10] sm:$0xff] %v630
        %635 = vst [vmem:[#allocation3 + $0x18] sm:$0xff] %v631
        %v636 = vld [vmem:[#allocation2] sm:$0xff]
        %v637 = vld [vmem:[#allocation2 + $0x8] sm:$0xff]
        %v638 = vld [vmem:[#allocation2 + $0x10] sm:$0xff]
        %642 = vrot.lane.b32.xlu0 %v636, 126
        %v643 = vpop.permute.xlu0 %642
        %644 = vrot.lane.b32.xlu0 %v637, 126
        %v645 = vpop.permute.xlu0 %644
        %646 = vrot.lane.b32.xlu0 %v638, 126
        %v647 = vpop.permute.xlu0 %646
        %v648 = vsel %vm352, %v643, %v645
        %v649 = vsel %vm352, %v645, %v647
        %v652 = vsel %vm270, %v648, 0.0
        %v653 = vsel %vm271, %v649, 0.0
        %654 = vst [vmem:[#allocation3 + $0x20] sm:$0xff] %v652
        %655 = vst [vmem:[#allocation3 + $0x28] sm:$0xff] %v653
        %v656 = vld [vmem:[#allocation2] sm:$0xff]
        %v657 = vld [vmem:[#allocation2 + $0x8] sm:$0xff]
        %v658 = vld [vmem:[#allocation2 + $0x10] sm:$0xff]
        %662 = vrot.lane.b32.xlu0 %v656, 112
        %v663 = vpop.permute.xlu0 %662
        %664 = vrot.lane.b32.xlu0 %v657, 112
        %v665 = vpop.permute.xlu0 %664
        %666 = vrot.lane.b32.xlu0 %v658, 112
        %v667 = vpop.permute.xlu0 %666
        %v668 = vsel %vm373, %v663, %v665
        %v669 = vsel %vm373, %v665, %v667
        %v672 = vsel %vm268, %v668, 0.0
        %v673 = vsel %vm269, %v669, 0.0
        %674 = vst [vmem:[#allocation3 + $0x30] sm:$0xff] %v672
        %675 = vst [vmem:[#allocation3 + $0x38] sm:$0xff] %v673
        %v676 = vld [vmem:[#allocation2] sm:$0xff]
        %v677 = vld [vmem:[#allocation2 + $0x8] sm:$0xff]
        %v678 = vld [vmem:[#allocation2 + $0x10] sm:$0xff]
        %682 = vrot.lane.b32.xlu0 %v676, 111
        %v683 = vpop.permute.xlu0 %682
        %684 = vrot.lane.b32.xlu0 %v677, 111
        %v685 = vpop.permute.xlu0 %684
        %686 = vrot.lane.b32.xlu0 %v678, 111
        %v687 = vpop.permute.xlu0 %686
        %v688 = vsel %vm394, %v683, %v685
        %v689 = vsel %vm394, %v685, %v687
        %692 = vst [vmem:[#allocation3 + $0x40] sm:$0xff] %v688
        %693 = vst [vmem:[#allocation3 + $0x48] sm:$0xff] %v689
        %v694 = vld [vmem:[#allocation2] sm:$0xff]
        %v695 = vld [vmem:[#allocation2 + $0x8] sm:$0xff]
        %v696 = vld [vmem:[#allocation2 + $0x10] sm:$0xff]
        %700 = vrot.lane.b32.xlu0 %v694, 110
        %v701 = vpop.permute.xlu0 %700
        %702 = vrot.lane.b32.xlu0 %v695, 110
        %v703 = vpop.permute.xlu0 %702
        %704 = vrot.lane.b32.xlu0 %v696, 110
        %v705 = vpop.permute.xlu0 %704
        %v706 = vsel %vm413, %v701, %v703
        %v707 = vsel %vm413, %v703, %v705
        %v710 = vsel %vm270, %v706, 0.0
        %v711 = vsel %vm271, %v707, 0.0
        %712 = vst [vmem:[#allocation3 + $0x50] sm:$0xff] %v710
        %713 = vst [vmem:[#allocation3 + $0x58] sm:$0xff] %v711
        %v714 = vld [vmem:[#allocation2] sm:$0xff]
        %v715 = vld [vmem:[#allocation2 + $0x8] sm:$0xff]
        %v716 = vld [vmem:[#allocation2 + $0x10] sm:$0xff]
        %720 = vrot.lane.b32.xlu0 %v714, 96
        %v721 = vpop.permute.xlu0 %720
        %722 = vrot.lane.b32.xlu0 %v715, 96
        %v723 = vpop.permute.xlu0 %722
        %724 = vrot.lane.b32.xlu0 %v716, 96
        %v725 = vpop.permute.xlu0 %724
        %v726 = vsel %vm434, %v721, %v723
        %v727 = vsel %vm434, %v723, %v725
        %v730 = vsel %vm268, %v726, 0.0
        %v731 = vsel %vm269, %v727, 0.0
        %732 = vst [vmem:[#allocation3 + $0x60] sm:$0xff] %v730
        %733 = vst [vmem:[#allocation3 + $0x68] sm:$0xff] %v731
        %v734 = vld [vmem:[#allocation2] sm:$0xff]
        %v735 = vld [vmem:[#allocation2 + $0x8] sm:$0xff]
        %v736 = vld [vmem:[#allocation2 + $0x10] sm:$0xff]
        %740 = vrot.lane.b32.xlu0 %v734, 95
        %v741 = vpop.permute.xlu0 %740
        %742 = vrot.lane.b32.xlu0 %v735, 95
        %v743 = vpop.permute.xlu0 %742
        %744 = vrot.lane.b32.xlu0 %v736, 95
        %v745 = vpop.permute.xlu0 %744
        %v746 = vsel %vm455, %v741, %v743
        %v747 = vsel %vm455, %v743, %v745
        %750 = vst [vmem:[#allocation3 + $0x70] sm:$0xff] %v746
        %751 = vst [vmem:[#allocation3 + $0x78] sm:$0xff] %v747
        %v752 = vld [vmem:[#allocation2] sm:$0xff]
        %v753 = vld [vmem:[#allocation2 + $0x8] sm:$0xff]
        %v754 = vld [vmem:[#allocation2 + $0x10] sm:$0xff]
        %758 = vrot.lane.b32.xlu0 %v752, 94
        %v759 = vpop.permute.xlu0 %758
        %760 = vrot.lane.b32.xlu0 %v753, 94
        %v761 = vpop.permute.xlu0 %760
        %762 = vrot.lane.b32.xlu0 %v754, 94
        %v763 = vpop.permute.xlu0 %762
        %v764 = vsel %vm474, %v759, %v761
        %v765 = vsel %vm474, %v761, %v763
        %v768 = vsel %vm270, %v764, 0.0
        %v769 = vsel %vm271, %v765, 0.0
        %770 = vst [vmem:[#allocation3 + $0x80] sm:$0xff] %v768
        %771 = vst [vmem:[#allocation3 + $0x88] sm:$0xff] %v769
        %v772 = vld [vmem:[%s214] sm:$0xff]
        %v773 = vld [vmem:[%s214 + $0x8] sm:$0xff]
        %774 = vst [vmem:[#allocation3 + $0x90] sm:$0xff] %v772
        %775 = vst [vmem:[#allocation3 + $0x98] sm:$0xff] %v773
        %v776 = vld [vmem:[#allocation3] sm:$0xff]
        %v777 = vld [vmem:[#allocation3 + $0x8] sm:$0xff]
        %v778 = vld [vmem:[#allocation3 + $0x10] sm:$0xff]
        %v779 = vld [vmem:[#allocation3 + $0x18] sm:$0xff]
        %v780 = vld [vmem:[#allocation3 + $0x20] sm:$0xff]
        %v781 = vld [vmem:[#allocation3 + $0x28] sm:$0xff]
        %v782 = vld [vmem:[#allocation3 + $0x30] sm:$0xff]
        %v783 = vld [vmem:[#allocation3 + $0x38] sm:$0xff]
        %v784 = vld [vmem:[#allocation3 + $0x40] sm:$0xff]
        %v785 = vld [vmem:[#allocation3 + $0x48] sm:$0xff]
        %v786 = vld [vmem:[#allocation3 + $0x50] sm:$0xff]
        %v787 = vld [vmem:[#allocation3 + $0x58] sm:$0xff]
        %v788 = vld [vmem:[#allocation3 + $0x60] sm:$0xff]
        %v789 = vld [vmem:[#allocation3 + $0x68] sm:$0xff]
        %v790 = vld [vmem:[#allocation3 + $0x70] sm:$0xff]
        %v791 = vld [vmem:[#allocation3 + $0x78] sm:$0xff]
        %v792 = vld [vmem:[#allocation3 + $0x80] sm:$0xff]
        %v793 = vld [vmem:[#allocation3 + $0x88] sm:$0xff]
        %v794 = vld [vmem:[#allocation3 + $0x90] sm:$0xff]
        %v795 = vld [vmem:[#allocation3 + $0x98] sm:$0xff]
        %797 = vset.pattern.permute.xlu0 0
        %798 = vperm.xlu0 %797, %v279
        %v799 = vpop.permute.xlu0 %798
        %vm801 = vcmask 654336
        %v803 = vsel %vm801, %v277, 0
        %805 = vmatprep.subr.mxu0 %v777
        %806 = vmatpush1.msra.mxu0 %v776
        %807 = vmatprep.subr.mxu0 %v779
        %808 = vmatpush1.msra.mxu0 %v778
        %809 = vmatprep.subr.mxu0 %v781
        %810 = vmatpush1.msra.mxu0 %v780
        %811 = vmatprep.subr.mxu0 %v783
        %812 = vmatpush1.msra.mxu0 %v782
        %813 = vmatprep.subr.mxu0 %v785
        %814 = vmatpush1.msra.mxu0 %v784
        %815 = vmatprep.subr.mxu0 %v787
        %816 = vmatpush1.msra.mxu0 %v786
        %817 = vmatprep.subr.mxu0 %v789
        %818 = vmatpush1.msra.mxu0 %v788
        %819 = vmatprep.subr.mxu0 %v791
        %820 = vmatpush1.msra.mxu0 %v790
        %821 = vmatprep.subr.mxu0 %v793
        %822 = vmatpush1.msra.mxu0 %v792
        %823 = vmatprep.subr.mxu0 %v795
        %824 = vmatpush1.msra.mxu0 %v794
        %825 = vmatprep.subr.mxu0 0.0
        %826 = vmatpush1.msra.mxu0 0.0
        %827 = vmatprep.subr.mxu0 0.0
        %828 = vmatpush1.msra.mxu0 0.0
        %829 = vmatprep.subr.mxu0 0.0
        %830 = vmatpush1.msra.mxu0 0.0
        %831 = vmatprep.subr.mxu0 0.0
        %832 = vmatpush1.msra.mxu0 0.0
        %833 = vmatprep.subr.mxu0 0.0
        %834 = vmatpush1.msra.mxu0 0.0
        %835 = vmatprep.subr.mxu0 0.0
        %836 = vmatpush1.msra.mxu0 0.0
        %837 = vmatprep.subr.mxu0 0.0
        %838 = vmatpush1.msra.mxu0 0.0
        %839 = vmatprep.subr.mxu0 0.0
        %840 = vmatpush1.msra.mxu0 0.0
        %841 = vmatprep.subr.mxu0 0.0
        %842 = vmatpush1.msra.mxu0 0.0
        %843 = vmatprep.subr.mxu0 0.0
        %844 = vmatpush1.msra.mxu0 0.0
        %845 = vmatprep.subr.mxu0 0.0
        %846 = vmatpush1.msra.mxu0 0.0
        %847 = vmatprep.subr.mxu0 0.0
        %848 = vmatpush1.msra.mxu0 0.0
        %849 = vmatprep.subr.mxu0 0.0
        %850 = vmatpush1.msra.mxu0 0.0
        %851 = vmatprep.subr.mxu0 0.0
        %852 = vmatpush1.msra.mxu0 0.0
        %853 = vmatprep.subr.mxu0 0.0
        %854 = vmatpush1.msra.mxu0 0.0
        %855 = vmatprep.subr.mxu0 0.0
        %856 = vmatpush1.msra.mxu0 0.0
        %857 = vmatprep.subr.mxu0 0.0
        %858 = vmatpush1.msra.mxu0 0.0
        %859 = vmatprep.subr.mxu0 0.0
        %860 = vmatpush1.msra.mxu0 0.0
        %861 = vmatprep.subr.mxu0 0.0
        %862 = vmatpush1.msra.mxu0 0.0
        %863 = vmatprep.subr.mxu0 0.0
        %864 = vmatpush1.msra.mxu0 0.0
        %865 = vmatprep.subr.mxu0 0.0
        %866 = vmatpush1.msra.mxu0 0.0
        %867 = vmatprep.subr.mxu0 0.0
        %868 = vmatpush1.msra.mxu0 0.0
        %869 = vmatprep.mubr.f32.mxu0 0.0
        %870 = vmatmul.mubr.f32.gmra.mrb[0].mxu0 %v803
        %v871 = vpop.f32.mrb[0].mxu0
        %v872 = vadd.f32 %v799, %v871
        %v873 = vpop.f32.mrb[0].mxu0
        %v874 = vadd.f32 %v799, %v873
        %875 = vdwg.mxu0
        %876 = vst [vmem:[%s240] sm:$0xff] %v872
        %877 = vst [vmem:[%s240 + $0x8] sm:$0xff] %v874
        %s878 = sand.u32 %s140, 1
        %s879 = scalar_lea.sflag [#allocation6], %s878
        %s880 = sand.u32 %s140, 1
        %s881 = smul.addr %s880, 16
        %s882 = scalar_lea.vmem [#allocation7], %s881
        // Predicated region
        $region45: #{tpu_custom_call.1} parent=39 // pred_check
          %p883 = pneg %p150
        $region46: #{tpu_custom_call.1} parent=39 // pred_check_branch
          %885 = sbr.rel (%p883) target = $region48
        $region47: #{tpu_custom_call.1} parent=39 // pred_region
          %s887 = ssub.s32 256, 256
          %888 = vsyncadd %s879, %s887
          %s889 = smul.addr %s22, 2
          %s890 = smul.addr %s889, 128
          %s891 = scalar_lea.hbm %s5, %s890
          %s893 = sshll.u32 %s882, 4
          %s894 = int_to_ptr.vmem [resolvable:$true] %s893
          %896 = dma.vmem_to_hbm [thread:$0]  %s894, 256, %s891, %s879
        $region48: #{tpu_custom_call.1} parent=39 // pred_fallthru
          _
      $region40: #{tpu_custom_call.1} parent=5 // pred_fallthru
        _
      %p897 = scmp.le.s32.totalorder 2, %s17
      // Predicated region
      $region49: #{tpu_custom_call.1} parent=5 // pred_check
        %p898 = pneg %p897
      $region50: #{tpu_custom_call.1} parent=5 // pred_check_branch
        %900 = sbr.rel (%p898) target = $region52
      $region51: #{tpu_custom_call.1} parent=5 // pred_region
        %s901 = ssub.s32 %s17, 2
        // Predicated region
        $region53: #{tpu_custom_call.1} parent=51 // pred_check
          %p902 = pneg %p156
        $region54: #{tpu_custom_call.1} parent=51 // pred_check_branch
          %904 = sbr.rel (%p902) target = $region56
        $region55: #{tpu_custom_call.1} parent=51 // pred_region
          %s905 = sand.u32 %s141, 1
          %s906 = scalar_lea.sflag [#allocation6], %s905
          %s907 = sand.u32 %s141, 1
          %s908 = smul.addr %s907, 16
          %s909 = scalar_lea.vmem [#allocation7], %s908
          %910 = dma.done %s906, 256
        $region56: #{tpu_custom_call.1} parent=51 // pred_fallthru
          _
      $region52: #{tpu_custom_call.1} parent=5 // pred_fallthru
        _
    $region6: #{tpu_custom_call.1} parent=1 // loop_footer
      %s21 = sadd.s32 1, %s17
    $region7: #{tpu_custom_call.1} parent=1 // loop_footer_branch
      %16 = sbr.rel target = $region3
    $region8: #{tpu_custom_call.1} parent=1 // loop_exit
      _
    %911 = vsyncpa [#allocation5], 1
    %s912 = scalar_lea.sflag [#allocation5], 1
    %913 = vsyncpa %s912, 1
    %914 = vsyncpa [#allocation6], 1
    %s915 = scalar_lea.sflag [#allocation6], 1
    %916 = vsyncpa %s915, 1

</llo_original>
